<compile_context>
chip_gen: v7x
topology: tpu7x:2x2x1
jax: 0.10.0
libtpu: 0.0.40
codegen_flags: <defaults>
</compile_context>

<pallas_src>
import functools

import jax
import jax.numpy as jnp
from jax.experimental import pallas as pl
from jax.experimental.pallas import tpu as pltpu

N_PATH = 4    # meta-paths (n_mat == 8 -> 4 U towers + 4 I towers)
ATT_H = 64    # attention hidden size (Attention.layer1 out features)


def _sigmoid(x):
    # Exact sigmoid (plain divide): review asked for exact math on the paths that shape
    # the prediction; exp still runs on the EUP, the divide is negligible at these sizes.
    return 1.0 / (1.0 + jnp.exp(-x))


def neuacf_kernel(x_ref, w_ref, b_ref, pred_ref, *, n, L):
    """One batch tile of the fused NeuACF forward.

    w_ref: (6*W, W) weight slab in compute dtype, six zero-padded (W, W) blocks:
        blk0 = block_diag(wu0_0..3, wi0_0..3)                (HIN layer 0)
        blk1 = block_diag(wu1_0..3, wi1_0..3)                (HIN layer 1)
        blk2 = block_diag(wa1_0..3) on the U-half rows       (Attention layer 1)
        blk3 = per-path attention layer-2 weights, col k     (Attention layer 2)
        blk4 = E: broadcasts merge weight k over path k's L lanes (U and I halves)
        blk5 = S: sums the 4 U blocks into cols [0,L) and the 4 I blocks into [L,2L)
    b_ref: (8, W) f32 bias slab, rows = b0 | b1 | ba1 | ba2 | zero padding.
    """
    cdt = w_ref.dtype
    f32 = jnp.float32
    W = w_ref.shape[1]

    def blk(k):                        # zero-cost static view of the k-th (W, W) block
        return w_ref[k * W:(k + 1) * W, :]

    bias = b_ref[...]                  # (8, W) f32, loaded once per tile

    x = x_ref[...]                     # (TM, W) lane-dense [U-features | I-features]

    # --- fused HIN towers (nlayer == 2): 8 block-diagonal towers, one matmul per layer ---
    h = jnp.maximum(jnp.dot(x, blk(0), preferred_element_type=f32) + bias[0:1, :], 0.0)
    z = jnp.dot(h.astype(cdt), blk(1), preferred_element_type=f32) + bias[1:2, :]
    # z = [U1 | U2 | U3 | U4 | I1 | I2 | I3 | I4]                       (TM, W)

    # --- 4 attention heads fused (blk2 rows past n*L are zero => only the U half matters) ---
    a1 = _sigmoid(jnp.dot(z.astype(cdt), blk(2), preferred_element_type=f32) + bias[2:3, :])
    logit = jnp.dot(a1.astype(cdt), blk(3), preferred_element_type=f32) + bias[3:4, :]
    w = jnp.exp(_sigmoid(logit))                        # cols >= n are padding (finite, unused)
    wsum = jnp.sum(w[:, 0:n], axis=-1, keepdims=True)   # normalize over the n real heads only
    wnorm = w / wsum                                    # exact divide (parity with torch)

    # --- attention-weighted merge: 2 matmuls + 1 elementwise pass on the fused z ---
    wwide = jnp.dot(wnorm.astype(cdt), blk(4), preferred_element_type=f32)        # (TM, W)
    ui = jnp.dot((wwide * z).astype(cdt), blk(5), preferred_element_type=f32)     # [U | I | 0]
    u_m = ui[:, 0:L]
    i_m = ui[:, L:2 * L]

    # cosineSim: sigmoid(sum(U * I, axis=1)).view(-1, 1)  — exact sigmoid for parity.
    pred_ref[...] = _sigmoid(jnp.sum(u_m * i_m, axis=1, keepdims=True))


def pack_params(p, compute_dtype=jnp.bfloat16):
    """One-time packing of all per-path weights into two contiguous slabs (see kernel doc)."""
    n, A = N_PATH, ATT_H
    F, H = p["wu0"].shape[1], p["wu0"].shape[2]
    L = p["wu1"].shape[2]
    W = -(-max(2 * n * F, 2 * n * H, 2 * n * L, n * A) // 128) * 128   # slab width (lane-dense)

    def put(slab, r, c, m):
        return slab.at[r:r + m.shape[0], c:c + m.shape[1]].set(m.astype(jnp.float32))

    wslab = jnp.zeros((6 * W, W), jnp.float32)
    bslab = jnp.zeros((8, W), jnp.float32)

    for k in range(n):
        # blk0 / blk1: HIN towers, 4 U then 4 I, block-diagonal.
        wslab = put(wslab, 0 * W + k * F, k * H, p["wu0"][k])
        wslab = put(wslab, 0 * W + (n + k) * F, (n + k) * H, p["wi0"][k])
        wslab = put(wslab, 1 * W + k * H, k * L, p["wu1"][k])
        wslab = put(wslab, 1 * W + (n + k) * H, (n + k) * L, p["wi1"][k])
        bslab = put(bslab, 0, k * H, p["bu0"][k])
        bslab = put(bslab, 0, (n + k) * H, p["bi0"][k])
        bslab = put(bslab, 1, k * L, p["bu1"][k])
        bslab = put(bslab, 1, (n + k) * L, p["bi1"][k])
        # blk2 / blk3: 4 attention heads.
        wslab = put(wslab, 2 * W + k * L, k * A, p["wa1"][k])
        bslab = put(bslab, 2, k * A, p["ba1"][k])
        wslab = put(wslab, 3 * W + k * A, k, p["wa2"][k].reshape(A, 1))
        bslab = put(bslab, 3, k, p["ba2"][k])

    # blk4 (E): row k is 1 on every lane belonging to meta-path k (both U and I halves).
    lane = jnp.arange(2 * n * L)
    e = (jnp.arange(n)[:, None] == (lane[None, :] // L) % n).astype(jnp.float32)
    wslab = put(wslab, 4 * W, 0, e)

    # blk5 (S): sums the 4 U blocks into cols [0,L) and the 4 I blocks into cols [L,2L).
    row = jnp.arange(2 * n * L)[:, None]
    col = jnp.arange(2 * L)[None, :]
    s = (((row < n * L) & (col < L) & (row % L == col)) |
         ((row >= n * L) & (col >= L) & (row % L == col - L))).astype(jnp.float32)
    wslab = put(wslab, 5 * W, 0, s)

    return {"w": wslab.astype(compute_dtype), "b": bslab, "n": n, "L": L, "W": W}


def neuacf_forward(u_input, i_input, packed, *, tm=512):
    """Fused NeuACF forward.  u_input, i_input: (B, n_path, F)."""
    B, n, F = u_input.shape
    cdt = packed["w"].dtype
    W = packed["W"]

    # Free contiguous reshape to the lane-dense layout expected by the block-diag weights.
    x = jnp.concatenate([u_input.reshape(B, n * F), i_input.reshape(B, n * F)], axis=1)

    # Batch row tile: multiples of 8 sublanes; capped so double-buffered activations fit the
    # v7x scoped-VMEM budget (64 MiB total there vs 128 MiB on v5e/v6e).
    tm = int(max(8, min(tm, 1024)))
    if B <= tm:
        tm = max(8, -(-B // 8) * 8)
    nt = pl.cdiv(B, tm)
    bp = nt * tm

    pad_rows, pad_cols = bp - B, W - x.shape[1]
    if pad_rows or pad_cols:
        x = jnp.pad(x, ((0, pad_rows), (0, pad_cols)))   # padded tail rows are sliced off below
    x = x.astype(cdt)

    wslab, bslab = packed["w"], packed["b"]
    kernel = functools.partial(neuacf_kernel, n=n, L=packed["L"])
    pred = pl.pallas_call(
        kernel,
        out_shape=jax.ShapeDtypeStruct((bp, 1), jnp.float32),
        grid_spec=pltpu.PrefetchScalarGridSpec(
            num_scalar_prefetch=0,
            grid=(nt,),
            in_specs=[
                pl.BlockSpec((tm, W), lambda i: (i, 0)),        # batch-tiled activations
                pl.BlockSpec(wslab.shape, lambda i: (0, 0)),    # resident weight slab
                pl.BlockSpec(bslab.shape, lambda i: (0, 0)),    # resident bias slab
            ],
            out_specs=pl.BlockSpec((tm, 1), lambda i: (i, 0)),
        ),
        compiler_params=pltpu.CompilerParams(
            # Batch tiles are independent -> v7x can split them across its 2 TensorCores.
            dimension_semantics=("parallel",)),
    )(x, wslab, bslab)
    # TODO(synk): for a fully lane-dense output, emit an (nt, tm) slab (batch folded into
    # lanes via a transposed final matmul) instead of the masked (tm, 1) stores.
    return pred[:B]


def init_params(key, F, H, L):
    # 4 meta-paths; Linear weights stored as (in, out): y = x @ W + b.
    ks = jax.random.split(key, 12)
    s = 0.1
    return {
        "wu0": jax.random.normal(ks[0], (4, F, H), jnp.float32) * s,
        "bu0": jax.random.normal(ks[1], (4, 1, H), jnp.float32) * s,
        "wu1": jax.random.normal(ks[2], (4, H, L), jnp.float32) * s,
        "bu1": jax.random.normal(ks[3], (4, 1, L), jnp.float32) * s,
        "wi0": jax.random.normal(ks[4], (4, F, H), jnp.float32) * s,
        "bi0": jax.random.normal(ks[5], (4, 1, H), jnp.float32) * s,
        "wi1": jax.random.normal(ks[6], (4, H, L), jnp.float32) * s,
        "bi1": jax.random.normal(ks[7], (4, 1, L), jnp.float32) * s,
        "wa1": jax.random.normal(ks[8], (4, L, 64), jnp.float32) * s,
        "ba1": jax.random.normal(ks[9], (4, 1, 64), jnp.float32) * s,
        "wa2": jax.random.normal(ks[10], (4, 1, 64), jnp.float32) * s,  # per-path (out=1, in=64)
        "ba2": jax.random.normal(ks[11], (4, 1, 1), jnp.float32) * s,
    }


def neuacf_reference(u_input, i_input, p):
    # Pure-JAX mirror of the PyTorch forward (n_mat=8, merge='attention', nlayer=2).
    u = jnp.transpose(u_input, (1, 0, 2))
    i = jnp.transpose(i_input, (1, 0, 2))
    Us, Is, Ws = [], [], []
    for k in range(4):
        hu = jax.nn.relu(u[k] @ p["wu0"][k] + p["bu0"][k])
        Uk = hu @ p["wu1"][k] + p["bu1"][k]
        hi = jax.nn.relu(i[k] @ p["wi0"][k] + p["bi0"][k])
        Ik = hi @ p["wi1"][k] + p["bi1"][k]
        a1 = jax.nn.sigmoid(Uk @ p["wa1"][k] + p["ba1"][k])
        a2 = jax.nn.sigmoid(jnp.sum(a1 * p["wa2"][k], axis=-1, keepdims=True) + p["ba2"][k])
        Us.append(Uk); Is.append(Ik); Ws.append(jnp.exp(a2))
    wsum = sum(Ws)
    U = sum((Ws[k] / wsum) * Us[k] for k in range(4))
    I = sum((Ws[k] / wsum) * Is[k] for k in range(4))
    return jax.nn.sigmoid(jnp.sum(U * I, axis=1, keepdims=True))


if __name__ == "__main__":
    B, F, H, L = 8, 32, 32, 32   # batch, per-path feature dim, hidden_size, last_layer_size
    key = jax.random.PRNGKey(0)
    k_u, k_i, k_p = jax.random.split(key, 3)

    u_input = jax.random.normal(k_u, (B, 4, F), jnp.float32)
    i_input = jax.random.normal(k_i, (B, 4, F), jnp.float32)
    params = init_params(k_p, F, H, L)

    ref = jax.block_until_ready(neuacf_reference(u_input, i_input, params))

    # f32 compute path (tight correctness check).
    packed_f32 = pack_params(params, jnp.float32)
    pred_f32 = jax.block_until_ready(neuacf_forward(u_input, i_input, packed_f32))
    assert pred_f32.shape == (B, 1)
    assert jnp.allclose(pred_f32, ref, atol=1e-2, rtol=1e-2), (pred_f32, ref)

    # bf16 weight pack: native MXU dtype on v5e/v6e/v7x (f32 accumulation + f32 bias/nonlinear).
    packed_bf16 = pack_params(params, jnp.bfloat16)
    pred_bf16 = jax.block_until_ready(neuacf_forward(u_input, i_input, packed_bf16))
    assert pred_bf16.shape == (B, 1)
    assert jnp.allclose(pred_bf16, ref, atol=3e-2, rtol=3e-2), (pred_bf16, ref)

    # Exercise the batch grid: multiple row tiles, resident weight slab, ragged padded tail.
    Bl = 300
    k_u2, k_i2 = jax.random.split(jax.random.PRNGKey(1))
    u_l = jax.random.normal(k_u2, (Bl, 4, F), jnp.float32)
    i_l = jax.random.normal(k_i2, (Bl, 4, F), jnp.float32)
    ref_l = jax.block_until_ready(neuacf_reference(u_l, i_l, params))
    pred_l = jax.block_until_ready(neuacf_forward(u_l, i_l, packed_bf16, tm=128))
    assert pred_l.shape == (Bl, 1)
    assert jnp.allclose(pred_l, ref_l, atol=3e-2, rtol=3e-2)

    print("KERNEL_OK")
</pallas_src>

<mosaic_0001>
module attributes {stable_mosaic.version = 11 : i64} {
  func.func @neuacf_kernel(%arg0: i32, %arg1: memref<8x256xf32, #tpu.memory_space<vmem>>, %arg2: memref<1536x256xf32, #tpu.memory_space<vmem>>, %arg3: memref<8x256xf32, #tpu.memory_space<vmem>>, %arg4: memref<8x1xf32, #tpu.memory_space<vmem>>) attributes {dimension_semantics = [#tpu.dimension_semantics<parallel>], iteration_bounds = array<i64: 1>, scalar_prefetch = 0 : i64, scratch_operands = 0 : i64, tpu.core_type = #tpu.core_type<tc>, window_params = [{transform_indices = @transform_0, window_bounds = array<i64: 8, 256>}, {pipeline_mode = #tpu.pipeline_mode<synchronous>, transform_indices = @transform_1, window_bounds = array<i64: 1536, 256>}, {pipeline_mode = #tpu.pipeline_mode<synchronous>, transform_indices = @transform_2, window_bounds = array<i64: 8, 256>}, {transform_indices = @transform_3, window_bounds = array<i64: 8, 1>}]} {
    %c0 = arith.constant 0 : index
    %c0_0 = arith.constant 0 : index
    %0 = vector.load %arg3[%c0, %c0_0] : memref<8x256xf32, #tpu.memory_space<vmem>>, vector<8x256xf32>
    %c0_1 = arith.constant 0 : index
    %c0_2 = arith.constant 0 : index
    %1 = vector.load %arg1[%c0_1, %c0_2] : memref<8x256xf32, #tpu.memory_space<vmem>>, vector<8x256xf32>
    %c0_3 = arith.constant 0 : index
    %c0_4 = arith.constant 0 : index
    %2 = vector.load %arg2[%c0_3, %c0_4] : memref<1536x256xf32, #tpu.memory_space<vmem>>, vector<256x256xf32>
    %cst = arith.constant dense<0.000000e+00> : vector<8x256xf32>
    %3 = tpu.matmul %1, %2, %cst {dimension_numbers = #tpu.dot_dimension_numbers<[1], [0], [0], [1], [0, 0, 1, 1], [], []>} : vector<8x256xf32>, vector<256x256xf32>, vector<8x256xf32> -> vector<8x256xf32>
    %4 = vector.extract_strided_slice %0 {offsets = [0, 0], sizes = [1, 256], strides = [1, 1]} : vector<8x256xf32> to vector<1x256xf32>
    %5 = vector.broadcast %4 : vector<1x256xf32> to vector<8x256xf32>
    %6 = arith.addf %3, %5 : vector<8x256xf32>
    %cst_5 = arith.constant 0.000000e+00 : f32
    %7 = vector.broadcast %cst_5 : f32 to vector<8x256xf32>
    %8 = arith.maximumf %6, %7 : vector<8x256xf32>
    %c256 = arith.constant 256 : index
    %c0_6 = arith.constant 0 : index
    %9 = vector.load %arg2[%c256, %c0_6] : memref<1536x256xf32, #tpu.memory_space<vmem>>, vector<256x256xf32>
    %cst_7 = arith.constant dense<0.000000e+00> : vector<8x256xf32>
    %10 = tpu.matmul %8, %9, %cst_7 {dimension_numbers = #tpu.dot_dimension_numbers<[1], [0], [0], [1], [0, 0, 1, 1], [], []>} : vector<8x256xf32>, vector<256x256xf32>, vector<8x256xf32> -> vector<8x256xf32>
    %11 = vector.extract_strided_slice %0 {offsets = [1, 0], sizes = [1, 256], strides = [1, 1]} : vector<8x256xf32> to vector<1x256xf32>
    %12 = vector.broadcast %11 : vector<1x256xf32> to vector<8x256xf32>
    %13 = arith.addf %10, %12 : vector<8x256xf32>
    %c512 = arith.constant 512 : index
    %c0_8 = arith.constant 0 : index
    %14 = vector.load %arg2[%c512, %c0_8] : memref<1536x256xf32, #tpu.memory_space<vmem>>, vector<256x256xf32>
    %cst_9 = arith.constant dense<0.000000e+00> : vector<8x256xf32>
    %15 = tpu.matmul %13, %14, %cst_9 {dimension_numbers = #tpu.dot_dimension_numbers<[1], [0], [0], [1], [0, 0, 1, 1], [], []>} : vector<8x256xf32>, vector<256x256xf32>, vector<8x256xf32> -> vector<8x256xf32>
    %16 = vector.extract_strided_slice %0 {offsets = [2, 0], sizes = [1, 256], strides = [1, 1]} : vector<8x256xf32> to vector<1x256xf32>
    %17 = vector.broadcast %16 : vector<1x256xf32> to vector<8x256xf32>
    %18 = arith.addf %15, %17 : vector<8x256xf32>
    %cst_10 = arith.constant 0.000000e+00 : f32
    %19 = vector.broadcast %cst_10 : f32 to vector<8x256xf32>
    %20 = arith.subf %19, %18 : vector<8x256xf32>
    %21 = math.exp %20 : vector<8x256xf32>
    %cst_11 = arith.constant 1.000000e+00 : f32
    %22 = vector.broadcast %cst_11 : f32 to vector<8x256xf32>
    %23 = arith.addf %22, %21 : vector<8x256xf32>
    %cst_12 = arith.constant 1.000000e+00 : f32
    %24 = vector.broadcast %cst_12 : f32 to vector<8x256xf32>
    %25 = arith.divf %24, %23 : vector<8x256xf32>
    %c768 = arith.constant 768 : index
    %c0_13 = arith.constant 0 : index
    %26 = vector.load %arg2[%c768, %c0_13] : memref<1536x256xf32, #tpu.memory_space<vmem>>, vector<256x256xf32>
    %cst_14 = arith.constant dense<0.000000e+00> : vector<8x256xf32>
    %27 = tpu.matmul %25, %26, %cst_14 {dimension_numbers = #tpu.dot_dimension_numbers<[1], [0], [0], [1], [0, 0, 1, 1], [], []>} : vector<8x256xf32>, vector<256x256xf32>, vector<8x256xf32> -> vector<8x256xf32>
    %28 = vector.extract_strided_slice %0 {offsets = [3, 0], sizes = [1, 256], strides = [1, 1]} : vector<8x256xf32> to vector<1x256xf32>
    %29 = vector.broadcast %28 : vector<1x256xf32> to vector<8x256xf32>
    %30 = arith.addf %27, %29 : vector<8x256xf32>
    %cst_15 = arith.constant 0.000000e+00 : f32
    %31 = vector.broadcast %cst_15 : f32 to vector<8x256xf32>
    %32 = arith.subf %31, %30 : vector<8x256xf32>
    %33 = math.exp %32 : vector<8x256xf32>
    %cst_16 = arith.constant 1.000000e+00 : f32
    %34 = vector.broadcast %cst_16 : f32 to vector<8x256xf32>
    %35 = arith.addf %34, %33 : vector<8x256xf32>
    %cst_17 = arith.constant 1.000000e+00 : f32
    %36 = vector.broadcast %cst_17 : f32 to vector<8x256xf32>
    %37 = arith.divf %36, %35 : vector<8x256xf32>
    %38 = math.exp %37 : vector<8x256xf32>
    %39 = vector.extract_strided_slice %38 {offsets = [0, 0], sizes = [8, 4], strides = [1, 1]} : vector<8x256xf32> to vector<8x4xf32>
    %cst_18 = arith.constant dense<0.000000e+00> : vector<8xf32>
    %40 = vector.multi_reduction <add>, %39, %cst_18 [1] : vector<8x4xf32> to vector<8xf32>
    %41 = vector.shape_cast %40 : vector<8xf32> to vector<8x1xf32>
    %42 = vector.broadcast %41 : vector<8x1xf32> to vector<8x256xf32>
    %43 = arith.divf %38, %42 : vector<8x256xf32>
    %c1024 = arith.constant 1024 : index
    %c0_19 = arith.constant 0 : index
    %44 = vector.load %arg2[%c1024, %c0_19] : memref<1536x256xf32, #tpu.memory_space<vmem>>, vector<256x256xf32>
    %cst_20 = arith.constant dense<0.000000e+00> : vector<8x256xf32>
    %45 = tpu.matmul %43, %44, %cst_20 {dimension_numbers = #tpu.dot_dimension_numbers<[1], [0], [0], [1], [0, 0, 1, 1], [], []>} : vector<8x256xf32>, vector<256x256xf32>, vector<8x256xf32> -> vector<8x256xf32>
    %46 = arith.mulf %45, %13 : vector<8x256xf32>
    %c1280 = arith.constant 1280 : index
    %c0_21 = arith.constant 0 : index
    %47 = vector.load %arg2[%c1280, %c0_21] : memref<1536x256xf32, #tpu.memory_space<vmem>>, vector<256x256xf32>
    %cst_22 = arith.constant dense<0.000000e+00> : vector<8x256xf32>
    %48 = tpu.matmul %46, %47, %cst_22 {dimension_numbers = #tpu.dot_dimension_numbers<[1], [0], [0], [1], [0, 0, 1, 1], [], []>} : vector<8x256xf32>, vector<256x256xf32>, vector<8x256xf32> -> vector<8x256xf32>
    %49 = vector.extract_strided_slice %48 {offsets = [0, 0], sizes = [8, 32], strides = [1, 1]} : vector<8x256xf32> to vector<8x32xf32>
    %50 = vector.extract_strided_slice %48 {offsets = [0, 32], sizes = [8, 32], strides = [1, 1]} : vector<8x256xf32> to vector<8x32xf32>
    %51 = arith.mulf %49, %50 : vector<8x32xf32>
    %cst_23 = arith.constant dense<0.000000e+00> : vector<8xf32>
    %52 = vector.multi_reduction <add>, %51, %cst_23 [1] : vector<8x32xf32> to vector<8xf32>
    %53 = vector.shape_cast %52 : vector<8xf32> to vector<8x1xf32>
    %cst_24 = arith.constant 0.000000e+00 : f32
    %54 = vector.broadcast %cst_24 : f32 to vector<8x1xf32>
    %55 = arith.subf %54, %53 : vector<8x1xf32>
    %56 = math.exp %55 : vector<8x1xf32>
    %cst_25 = arith.constant 1.000000e+00 : f32
    %57 = vector.broadcast %cst_25 : f32 to vector<8x1xf32>
    %58 = arith.addf %57, %56 : vector<8x1xf32>
    %cst_26 = arith.constant 1.000000e+00 : f32
    %59 = vector.broadcast %cst_26 : f32 to vector<8x1xf32>
    %60 = arith.divf %59, %58 : vector<8x1xf32>
    %c0_27 = arith.constant 0 : index
    %c0_28 = arith.constant 0 : index
    %61 = vector.load %arg4[%c0_27, %c0_28] : memref<8x1xf32, #tpu.memory_space<vmem>>, vector<8x1xf32>
    tpu.vector_store %arg4[%c0_27, %c0_28], %60 {strides = array<i32>} : memref<8x1xf32, #tpu.memory_space<vmem>>, vector<8x1xf32>,
    return
  }
  func.func @transform_0(%arg0: i32) -> (i32, i32) {
    %c0_i32 = arith.constant 0 : i32
    %c0_i32_0 = arith.constant 0 : i32
    return %arg0, %c0_i32 : i32, i32
  }
  func.func @transform_1(%arg0: i32) -> (i32, i32) {
    %c0_i32 = arith.constant 0 : i32
    %c0_i32_0 = arith.constant 0 : i32
    %c0_i32_1 = arith.constant 0 : i32
    return %c0_i32, %c0_i32_0 : i32, i32
  }
  func.func @transform_2(%arg0: i32) -> (i32, i32) {
    %c0_i32 = arith.constant 0 : i32
    %c0_i32_0 = arith.constant 0 : i32
    %c0_i32_1 = arith.constant 0 : i32
    return %c0_i32, %c0_i32_0 : i32, i32
  }
  func.func @transform_3(%arg0: i32) -> (i32, i32) {
    %c0_i32 = arith.constant 0 : i32
    %c0_i32_0 = arith.constant 0 : i32
    return %arg0, %c0_i32 : i32, i32
  }
}

</mosaic_0001>

<llo_original>
// kernel: tpu_custom_call.1
$region0: #{tpu_custom_call.1}
  #allocation0 [shape = 'u32[]', space=smem, size = 0x4, offset = 0x4, fixed_abs, tag = 'smem constant byte address 0x4 - core index']
  #allocation1 [shape = 'u32[144,128]{1,0:T(1,128)}', space=vmem, size = 0x12000, scoped, tag = 'internal scratch']
  %s0 = inlined_call_operand.hbm [shape: f32[8,256], index: 0, kind: input, shape index: {}]
  %s1 = inlined_call_operand.hbm [shape: f32[1536,256], index: 1, kind: input, shape index: {}]
  %s2 = inlined_call_operand.hbm [shape: f32[8,256], index: 2, kind: input, shape index: {}]
  %s3 = inlined_call_operand.vmem [shape: f32[8,1], index: 3, kind: output, shape index: {}]
  %s4 = sld [smem:[#allocation0]]
  $region34: #{tpu_custom_call.1} parent=0
    _
  %s6 = ssub.s32 1, %s4
  %s7 = scalar_select 0, %s6, %s4
  $region1: #{tpu_custom_call.1} parent=0
    #allocation2 [shape = 'u8[8192]{0}', space=vmem, size = 0x2000, scoped, tag = 'input window, operand 0, single buffered']
    #allocation3 [shape = 's32[1]{0}', space=sflag, size = 0x4, scoped, tag = 'scoped memory for tpu_custom_call.1']
    #allocation4 [shape = 'u8[1572864]{0}', space=vmem, size = 0x180000, scoped, tag = 'input window, operand 1, single buffered']
    #allocation5 [shape = 's32[1]{0}', space=sflag, size = 0x4, scoped, tag = 'scoped memory for tpu_custom_call.1']
    #allocation6 [shape = 'u8[8192]{0}', space=vmem, size = 0x2000, scoped, tag = 'input window, operand 2, single buffered']
    %8 = vsyncpa [#allocation3], 0
    %9 = vsyncpa [#allocation5], 0
    // Predicated region
    $region2: #{tpu_custom_call.1} parent=1 // pred_check
      _
    $region3: #{tpu_custom_call.1} parent=1 // pred_check_branch
      %11 = sbr.rel (0) target = $region5
    $region4: #{tpu_custom_call.1} parent=1 // pred_region
      %s13 = ssub.s32 256, 256
      %14 = vsyncadd [#allocation3], %s13
      %s16 = sshll.u32 [#allocation2], 4
      %s17 = int_to_ptr.vmem [resolvable:$true] %s16
      %19 = dma.hbm_to_vmem [thread:$0]  %s0, 256, %s17, [#allocation3]
    $region5: #{tpu_custom_call.1} parent=1 // pred_fallthru
      _
    // Predicated region
    $region6: #{tpu_custom_call.1} parent=1 // pred_check
      _
    $region7: #{tpu_custom_call.1} parent=1 // pred_check_branch
      %21 = sbr.rel (0) target = $region9
    $region8: #{tpu_custom_call.1} parent=1 // pred_region
      %s23 = ssub.s32 49152, 49152
      %24 = vsyncadd [#allocation5], %s23
      %s25 = sshll.u32 [#allocation4], 4
      %s26 = int_to_ptr.vmem [resolvable:$true] %s25
      %31 = dma.hbm_to_vmem [thread:$0]  %s1, 49152, %s26, [#allocation5], 256, 256, 16
    $region9: #{tpu_custom_call.1} parent=1 // pred_fallthru
      _
    // Predicated region
    $region10: #{tpu_custom_call.1} parent=1 // pred_check
      _
    $region11: #{tpu_custom_call.1} parent=1 // pred_check_branch
      %33 = sbr.rel (0) target = $region13
    $region12: #{tpu_custom_call.1} parent=1 // pred_region
      %s35 = ssub.s32 256, 256
      %36 = vsyncadd [#allocation5], %s35
      %s38 = sshll.u32 [#allocation6], 4
      %s39 = int_to_ptr.vmem [resolvable:$true] %s38
      %41 = dma.hbm_to_vmem [thread:$0]  %s2, 256, %s39, [#allocation5]
    $region13: #{tpu_custom_call.1} parent=1 // pred_fallthru
      _
    // Predicated region
    $region14: #{tpu_custom_call.1} parent=1 // pred_check
      _
    $region15: #{tpu_custom_call.1} parent=1 // pred_check_branch
      %43 = sbr.rel (0) target = $region17
    $region16: #{tpu_custom_call.1} parent=1 // pred_region
      %44 = dma.done [#allocation3], 256
    $region17: #{tpu_custom_call.1} parent=1 // pred_fallthru
      _
    // Predicated region
    $region18: #{tpu_custom_call.1} parent=1 // pred_check
      _
    $region19: #{tpu_custom_call.1} parent=1 // pred_check_branch
      %46 = sbr.rel (0) target = $region21
    $region20: #{tpu_custom_call.1} parent=1 // pred_region
      %47 = dma.done [#allocation5], 49152
    $region21: #{tpu_custom_call.1} parent=1 // pred_fallthru
      _
    // Predicated region
    $region22: #{tpu_custom_call.1} parent=1 // pred_check
      _
    $region23: #{tpu_custom_call.1} parent=1 // pred_check_branch
      %49 = sbr.rel (0) target = $region25
    $region24: #{tpu_custom_call.1} parent=1 // pred_region
      %50 = dma.done [#allocation5], 256
    $region25: #{tpu_custom_call.1} parent=1 // pred_fallthru
      _
    %v51 = vld [vmem:[#allocation6] sm:$0xff]
    %v52 = vld [vmem:[#allocation6 + $0x8] sm:$0xff]
    %v53 = vld [vmem:[#allocation2] sm:$0xff]
    %v54 = vld [vmem:[#allocation2 + $0x8] sm:$0xff]
    %v55 = vld [vmem:[#allocation4] sm:$0xff]
    %v56 = vld [vmem:[#allocation4 + $0x8] sm:$0xff]
    %v57 = vld [vmem:[#allocation4 + $0x10] sm:$0xff]
    %v58 = vld [vmem:[#allocation4 + $0x18] sm:$0xff]
    %v59 = vld [vmem:[#allocation4 + $0x20] sm:$0xff]
    %v60 = vld [vmem:[#allocation4 + $0x28] sm:$0xff]
    %v61 = vld [vmem:[#allocation4 + $0x30] sm:$0xff]
    %v62 = vld [vmem:[#allocation4 + $0x38] sm:$0xff]
    %v63 = vld [vmem:[#allocation4 + $0x40] sm:$0xff]
    %v64 = vld [vmem:[#allocation4 + $0x48] sm:$0xff]
    %v65 = vld [vmem:[#allocation4 + $0x50] sm:$0xff]
    %v66 = vld [vmem:[#allocation4 + $0x58] sm:$0xff]
    %v67 = vld [vmem:[#allocation4 + $0x60] sm:$0xff]
    %v68 = vld [vmem:[#allocation4 + $0x68] sm:$0xff]
    %v69 = vld [vmem:[#allocation4 + $0x70] sm:$0xff]
    %v70 = vld [vmem:[#allocation4 + $0x78] sm:$0xff]
    %v71 = vld [vmem:[#allocation4 + $0x80] sm:$0xff]
    %v72 = vld [vmem:[#allocation4 + $0x88] sm:$0xff]
    %v73 = vld [vmem:[#allocation4 + $0x90] sm:$0xff]
    %v74 = vld [vmem:[#allocation4 + $0x98] sm:$0xff]
    %v75 = vld [vmem:[#allocation4 + $0xa0] sm:$0xff]
    %v76 = vld [vmem:[#allocation4 + $0xa8] sm:$0xff]
    %v77 = vld [vmem:[#allocation4 + $0xb0] sm:$0xff]
    %v78 = vld [vmem:[#allocation4 + $0xb8] sm:$0xff]
    %v79 = vld [vmem:[#allocation4 + $0xc0] sm:$0xff]
    %v80 = vld [vmem:[#allocation4 + $0xc8] sm:$0xff]
    %v81 = vld [vmem:[#allocation4 + $0xd0] sm:$0xff]
    %v82 = vld [vmem:[#allocation4 + $0xd8] sm:$0xff]
    %v83 = vld [vmem:[#allocation4 + $0xe0] sm:$0xff]
    %v84 = vld [vmem:[#allocation4 + $0xe8] sm:$0xff]
    %v85 = vld [vmem:[#allocation4 + $0xf0] sm:$0xff]
    %v86 = vld [vmem:[#allocation4 + $0xf8] sm:$0xff]
    %v87 = vld [vmem:[#allocation4 + $0x100] sm:$0xff]
    %v88 = vld [vmem:[#allocation4 + $0x108] sm:$0xff]
    %v89 = vld [vmem:[#allocation4 + $0x110] sm:$0xff]
    %v90 = vld [vmem:[#allocation4 + $0x118] sm:$0xff]
    %v91 = vld [vmem:[#allocation4 + $0x120] sm:$0xff]
    %v92 = vld [vmem:[#allocation4 + $0x128] sm:$0xff]
    %v93 = vld [vmem:[#allocation4 + $0x130] sm:$0xff]
    %v94 = vld [vmem:[#allocation4 + $0x138] sm:$0xff]
    %v95 = vld [vmem:[#allocation4 + $0x140] sm:$0xff]
    %v96 = vld [vmem:[#allocation4 + $0x148] sm:$0xff]
    %v97 = vld [vmem:[#allocation4 + $0x150] sm:$0xff]
    %v98 = vld [vmem:[#allocation4 + $0x158] sm:$0xff]
    %v99 = vld [vmem:[#allocation4 + $0x160] sm:$0xff]
    %v100 = vld [vmem:[#allocation4 + $0x168] sm:$0xff]
    %v101 = vld [vmem:[#allocation4 + $0x170] sm:$0xff]
    %v102 = vld [vmem:[#allocation4 + $0x178] sm:$0xff]
    %v103 = vld [vmem:[#allocation4 + $0x180] sm:$0xff]
    %v104 = vld [vmem:[#allocation4 + $0x188] sm:$0xff]
    %v105 = vld [vmem:[#allocation4 + $0x190] sm:$0xff]
    %v106 = vld [vmem:[#allocation4 + $0x198] sm:$0xff]
    %v107 = vld [vmem:[#allocation4 + $0x1a0] sm:$0xff]
    %v108 = vld [vmem:[#allocation4 + $0x1a8] sm:$0xff]
    %v109 = vld [vmem:[#allocation4 + $0x1b0] sm:$0xff]
    %v110 = vld [vmem:[#allocation4 + $0x1b8] sm:$0xff]
    %v111 = vld [vmem:[#allocation4 + $0x1c0] sm:$0xff]
    %v112 = vld [vmem:[#allocation4 + $0x1c8] sm:$0xff]
    %v113 = vld [vmem:[#allocation4 + $0x1d0] sm:$0xff]
    %v114 = vld [vmem:[#allocation4 + $0x1d8] sm:$0xff]
    %v115 = vld [vmem:[#allocation4 + $0x1e0] sm:$0xff]
    %v116 = vld [vmem:[#allocation4 + $0x1e8] sm:$0xff]
    %v117 = vld [vmem:[#allocation4 + $0x1f0] sm:$0xff]
    %v118 = vld [vmem:[#allocation4 + $0x1f8] sm:$0xff]
    %v119 = vlaneseq
    %v120 = vshrl.u32 %v119, 7
    %v121 = vsub.s32 0, %v120
    %v122 = vrot.slane %v51, %v121
    %v123 = vlaneseq
    %v124 = vshrl.u32 %v123, 7
    %v125 = vsub.s32 0, %v124
    %v126 = vrot.slane %v52, %v125
    %127 = vmatprep.subr.mxu0 %v56
    %128 = vmatpush1.msra.mxu0 %v55
    %129 = vmatprep.subr.mxu0 %v58
    %130 = vmatpush1.msra.mxu0 %v57
    %131 = vmatprep.subr.mxu0 %v60
    %132 = vmatpush1.msra.mxu0 %v59
    %133 = vmatprep.subr.mxu0 %v62
    %134 = vmatpush1.msra.mxu0 %v61
    %135 = vmatprep.subr.mxu0 %v64
    %136 = vmatpush1.msra.mxu0 %v63
    %137 = vmatprep.subr.mxu0 %v66
    %138 = vmatpush1.msra.mxu0 %v65
    %139 = vmatprep.subr.mxu0 %v68
    %140 = vmatpush1.msra.mxu0 %v67
    %141 = vmatprep.subr.mxu0 %v70
    %142 = vmatpush1.msra.mxu0 %v69
    %143 = vmatprep.subr.mxu0 %v72
    %144 = vmatpush1.msra.mxu0 %v71
    %145 = vmatprep.subr.mxu0 %v74
    %146 = vmatpush1.msra.mxu0 %v73
    %147 = vmatprep.subr.mxu0 %v76
    %148 = vmatpush1.msra.mxu0 %v75
    %149 = vmatprep.subr.mxu0 %v78
    %150 = vmatpush1.msra.mxu0 %v77
    %151 = vmatprep.subr.mxu0 %v80
    %152 = vmatpush1.msra.mxu0 %v79
    %153 = vmatprep.subr.mxu0 %v82
    %154 = vmatpush1.msra.mxu0 %v81
    %155 = vmatprep.subr.mxu0 %v84
    %156 = vmatpush1.msra.mxu0 %v83
    %157 = vmatprep.subr.mxu0 %v86
    %158 = vmatpush1.msra.mxu0 %v85
    %159 = vmatprep.subr.mxu0 %v88
    %160 = vmatpush1.msra.mxu0 %v87
    %161 = vmatprep.subr.mxu0 %v90
    %162 = vmatpush1.msra.mxu0 %v89
    %163 = vmatprep.subr.mxu0 %v92
    %164 = vmatpush1.msra.mxu0 %v91
    %165 = vmatprep.subr.mxu0 %v94
    %166 = vmatpush1.msra.mxu0 %v93
    %167 = vmatprep.subr.mxu0 %v96
    %168 = vmatpush1.msra.mxu0 %v95
    %169 = vmatprep.subr.mxu0 %v98
    %170 = vmatpush1.msra.mxu0 %v97
    %171 = vmatprep.subr.mxu0 %v100
    %172 = vmatpush1.msra.mxu0 %v99
    %173 = vmatprep.subr.mxu0 %v102
    %174 = vmatpush1.msra.mxu0 %v101
    %175 = vmatprep.subr.mxu0 %v104
    %176 = vmatpush1.msra.mxu0 %v103
    %177 = vmatprep.subr.mxu0 %v106
    %178 = vmatpush1.msra.mxu0 %v105
    %179 = vmatprep.subr.mxu0 %v108
    %180 = vmatpush1.msra.mxu0 %v107
    %181 = vmatprep.subr.mxu0 %v110
    %182 = vmatpush1.msra.mxu0 %v109
    %183 = vmatprep.subr.mxu0 %v112
    %184 = vmatpush1.msra.mxu0 %v111
    %185 = vmatprep.subr.mxu0 %v114
    %186 = vmatpush1.msra.mxu0 %v113
    %187 = vmatprep.subr.mxu0 %v116
    %188 = vmatpush1.msra.mxu0 %v115
    %189 = vmatprep.subr.mxu0 %v118
    %190 = vmatpush1.msra.mxu0 %v117
    %191 = vmatprep.mubr.f32.mxu0 %v54
    %192 = vmatmul.mubr.f32.gmra.mrb[0].mxu0 %v53
    %v193 = vpop.f32.mrb[0].mxu0
    %v194 = vadd.f32 %v122, %v193
    %v195 = vpop.f32.mrb[0].mxu0
    %v196 = vadd.f32 %v126, %v195
    %197 = vdwg.mxu0
    %v198 = vmax.f32 %v194, 0.0
    %v199 = vmax.f32 %v196, 0.0
    %v200 = vld [vmem:[#allocation4 + $0x200] sm:$0xff]
    %v201 = vld [vmem:[#allocation4 + $0x208] sm:$0xff]
    %v202 = vld [vmem:[#allocation4 + $0x210] sm:$0xff]
    %v203 = vld [vmem:[#allocation4 + $0x218] sm:$0xff]
    %v204 = vld [vmem:[#allocation4 + $0x220] sm:$0xff]
    %v205 = vld [vmem:[#allocation4 + $0x228] sm:$0xff]
    %v206 = vld [vmem:[#allocation4 + $0x230] sm:$0xff]
    %v207 = vld [vmem:[#allocation4 + $0x238] sm:$0xff]
    %v208 = vld [vmem:[#allocation4 + $0x240] sm:$0xff]
    %v209 = vld [vmem:[#allocation4 + $0x248] sm:$0xff]
    %v210 = vld [vmem:[#allocation4 + $0x250] sm:$0xff]
    %v211 = vld [vmem:[#allocation4 + $0x258] sm:$0xff]
    %v212 = vld [vmem:[#allocation4 + $0x260] sm:$0xff]
    %v213 = vld [vmem:[#allocation4 + $0x268] sm:$0xff]
    %v214 = vld [vmem:[#allocation4 + $0x270] sm:$0xff]
    %v215 = vld [vmem:[#allocation4 + $0x278] sm:$0xff]
    %v216 = vld [vmem:[#allocation4 + $0x280] sm:$0xff]
    %v217 = vld [vmem:[#allocation4 + $0x288] sm:$0xff]
    %v218 = vld [vmem:[#allocation4 + $0x290] sm:$0xff]
    %v219 = vld [vmem:[#allocation4 + $0x298] sm:$0xff]
    %v220 = vld [vmem:[#allocation4 + $0x2a0] sm:$0xff]
    %v221 = vld [vmem:[#allocation4 + $0x2a8] sm:$0xff]
    %v222 = vld [vmem:[#allocation4 + $0x2b0] sm:$0xff]
    %v223 = vld [vmem:[#allocation4 + $0x2b8] sm:$0xff]
    %v224 = vld [vmem:[#allocation4 + $0x2c0] sm:$0xff]
    %v225 = vld [vmem:[#allocation4 + $0x2c8] sm:$0xff]
    %v226 = vld [vmem:[#allocation4 + $0x2d0] sm:$0xff]
    %v227 = vld [vmem:[#allocation4 + $0x2d8] sm:$0xff]
    %v228 = vld [vmem:[#allocation4 + $0x2e0] sm:$0xff]
    %v229 = vld [vmem:[#allocation4 + $0x2e8] sm:$0xff]
    %v230 = vld [vmem:[#allocation4 + $0x2f0] sm:$0xff]
    %v231 = vld [vmem:[#allocation4 + $0x2f8] sm:$0xff]
    %v232 = vld [vmem:[#allocation4 + $0x300] sm:$0xff]
    %v233 = vld [vmem:[#allocation4 + $0x308] sm:$0xff]
    %v234 = vld [vmem:[#allocation4 + $0x310] sm:$0xff]
    %v235 = vld [vmem:[#allocation4 + $0x318] sm:$0xff]
    %v236 = vld [vmem:[#allocation4 + $0x320] sm:$0xff]
    %v237 = vld [vmem:[#allocation4 + $0x328] sm:$0xff]
    %v238 = vld [vmem:[#allocation4 + $0x330] sm:$0xff]
    %v239 = vld [vmem:[#allocation4 + $0x338] sm:$0xff]
    %v240 = vld [vmem:[#allocation4 + $0x340] sm:$0xff]
    %v241 = vld [vmem:[#allocation4 + $0x348] sm:$0xff]
    %v242 = vld [vmem:[#allocation4 + $0x350] sm:$0xff]
    %v243 = vld [vmem:[#allocation4 + $0x358] sm:$0xff]
    %v244 = vld [vmem:[#allocation4 + $0x360] sm:$0xff]
    %v245 = vld [vmem:[#allocation4 + $0x368] sm:$0xff]
    %v246 = vld [vmem:[#allocation4 + $0x370] sm:$0xff]
    %v247 = vld [vmem:[#allocation4 + $0x378] sm:$0xff]
    %v248 = vld [vmem:[#allocation4 + $0x380] sm:$0xff]
    %v249 = vld [vmem:[#allocation4 + $0x388] sm:$0xff]
    %v250 = vld [vmem:[#allocation4 + $0x390] sm:$0xff]
    %v251 = vld [vmem:[#allocation4 + $0x398] sm:$0xff]
    %v252 = vld [vmem:[#allocation4 + $0x3a0] sm:$0xff]
    %v253 = vld [vmem:[#allocation4 + $0x3a8] sm:$0xff]
    %v254 = vld [vmem:[#allocation4 + $0x3b0] sm:$0xff]
    %v255 = vld [vmem:[#allocation4 + $0x3b8] sm:$0xff]
    %v256 = vld [vmem:[#allocation4 + $0x3c0] sm:$0xff]
    %v257 = vld [vmem:[#allocation4 + $0x3c8] sm:$0xff]
    %v258 = vld [vmem:[#allocation4 + $0x3d0] sm:$0xff]
    %v259 = vld [vmem:[#allocation4 + $0x3d8] sm:$0xff]
    %v260 = vld [vmem:[#allocation4 + $0x3e0] sm:$0xff]
    %v261 = vld [vmem:[#allocation4 + $0x3e8] sm:$0xff]
    %v262 = vld [vmem:[#allocation4 + $0x3f0] sm:$0xff]
    %v263 = vld [vmem:[#allocation4 + $0x3f8] sm:$0xff]
    %v264 = vlaneseq
    %v265 = vshrl.u32 %v264, 7
    %v266 = vsub.s32 1, %v265
    %v267 = vrot.slane %v51, %v266
    %v268 = vlaneseq
    %v269 = vshrl.u32 %v268, 7
    %v270 = vsub.s32 1, %v269
    %v271 = vrot.slane %v52, %v270
    %272 = vmatprep.subr.mxu0 %v201
    %273 = vmatpush1.msra.mxu0 %v200
    %274 = vmatprep.subr.mxu0 %v203
    %275 = vmatpush1.msra.mxu0 %v202
    %276 = vmatprep.subr.mxu0 %v205
    %277 = vmatpush1.msra.mxu0 %v204
    %278 = vmatprep.subr.mxu0 %v207
    %279 = vmatpush1.msra.mxu0 %v206
    %280 = vmatprep.subr.mxu0 %v209
    %281 = vmatpush1.msra.mxu0 %v208
    %282 = vmatprep.subr.mxu0 %v211
    %283 = vmatpush1.msra.mxu0 %v210
    %284 = vmatprep.subr.mxu0 %v213
    %285 = vmatpush1.msra.mxu0 %v212
    %286 = vmatprep.subr.mxu0 %v215
    %287 = vmatpush1.msra.mxu0 %v214
    %288 = vmatprep.subr.mxu0 %v217
    %289 = vmatpush1.msra.mxu0 %v216
    %290 = vmatprep.subr.mxu0 %v219
    %291 = vmatpush1.msra.mxu0 %v218
    %292 = vmatprep.subr.mxu0 %v221
    %293 = vmatpush1.msra.mxu0 %v220
    %294 = vmatprep.subr.mxu0 %v223
    %295 = vmatpush1.msra.mxu0 %v222
    %296 = vmatprep.subr.mxu0 %v225
    %297 = vmatpush1.msra.mxu0 %v224
    %298 = vmatprep.subr.mxu0 %v227
    %299 = vmatpush1.msra.mxu0 %v226
    %300 = vmatprep.subr.mxu0 %v229
    %301 = vmatpush1.msra.mxu0 %v228
    %302 = vmatprep.subr.mxu0 %v231
    %303 = vmatpush1.msra.mxu0 %v230
    %304 = vmatprep.subr.mxu0 %v233
    %305 = vmatpush1.msra.mxu0 %v232
    %306 = vmatprep.subr.mxu0 %v235
    %307 = vmatpush1.msra.mxu0 %v234
    %308 = vmatprep.subr.mxu0 %v237
    %309 = vmatpush1.msra.mxu0 %v236
    %310 = vmatprep.subr.mxu0 %v239
    %311 = vmatpush1.msra.mxu0 %v238
    %312 = vmatprep.subr.mxu0 %v241
    %313 = vmatpush1.msra.mxu0 %v240
    %314 = vmatprep.subr.mxu0 %v243
    %315 = vmatpush1.msra.mxu0 %v242
    %316 = vmatprep.subr.mxu0 %v245
    %317 = vmatpush1.msra.mxu0 %v244
    %318 = vmatprep.subr.mxu0 %v247
    %319 = vmatpush1.msra.mxu0 %v246
    %320 = vmatprep.subr.mxu0 %v249
    %321 = vmatpush1.msra.mxu0 %v248
    %322 = vmatprep.subr.mxu0 %v251
    %323 = vmatpush1.msra.mxu0 %v250
    %324 = vmatprep.subr.mxu0 %v253
    %325 = vmatpush1.msra.mxu0 %v252
    %326 = vmatprep.subr.mxu0 %v255
    %327 = vmatpush1.msra.mxu0 %v254
    %328 = vmatprep.subr.mxu0 %v257
    %329 = vmatpush1.msra.mxu0 %v256
    %330 = vmatprep.subr.mxu0 %v259
    %331 = vmatpush1.msra.mxu0 %v258
    %332 = vmatprep.subr.mxu0 %v261
    %333 = vmatpush1.msra.mxu0 %v260
    %334 = vmatprep.subr.mxu0 %v263
    %335 = vmatpush1.msra.mxu0 %v262
    %336 = vmatprep.mubr.f32.mxu0 %v199
    %337 = vmatmul.mubr.f32.gmra.mrb[0].mxu0 %v198
    %v338 = vpop.f32.mrb[0].mxu0
    %v339 = vadd.f32 %v267, %v338
    %v340 = vpop.f32.mrb[0].mxu0
    %v341 = vadd.f32 %v271, %v340
    %342 = vdwg.mxu0
    %v343 = vld [vmem:[#allocation4 + $0x400] sm:$0xff]
    %v344 = vld [vmem:[#allocation4 + $0x408] sm:$0xff]
    %v345 = vld [vmem:[#allocation4 + $0x410] sm:$0xff]
    %v346 = vld [vmem:[#allocation4 + $0x418] sm:$0xff]
    %v347 = vld [vmem:[#allocation4 + $0x420] sm:$0xff]
    %v348 = vld [vmem:[#allocation4 + $0x428] sm:$0xff]
    %v349 = vld [vmem:[#allocation4 + $0x430] sm:$0xff]
    %v350 = vld [vmem:[#allocation4 + $0x438] sm:$0xff]
    %v351 = vld [vmem:[#allocation4 + $0x440] sm:$0xff]
    %v352 = vld [vmem:[#allocation4 + $0x448] sm:$0xff]
    %v353 = vld [vmem:[#allocation4 + $0x450] sm:$0xff]
    %v354 = vld [vmem:[#allocation4 + $0x458] sm:$0xff]
    %v355 = vld [vmem:[#allocation4 + $0x460] sm:$0xff]
    %v356 = vld [vmem:[#allocation4 + $0x468] sm:$0xff]
    %v357 = vld [vmem:[#allocation4 + $0x470] sm:$0xff]
    %v358 = vld [vmem:[#allocation4 + $0x478] sm:$0xff]
    %v359 = vld [vmem:[#allocation4 + $0x480] sm:$0xff]
    %v360 = vld [vmem:[#allocation4 + $0x488] sm:$0xff]
    %v361 = vld [vmem:[#allocation4 + $0x490] sm:$0xff]
    %v362 = vld [vmem:[#allocation4 + $0x498] sm:$0xff]
    %v363 = vld [vmem:[#allocation4 + $0x4a0] sm:$0xff]
    %v364 = vld [vmem:[#allocation4 + $0x4a8] sm:$0xff]
    %v365 = vld [vmem:[#allocation4 + $0x4b0] sm:$0xff]
    %v366 = vld [vmem:[#allocation4 + $0x4b8] sm:$0xff]
    %v367 = vld [vmem:[#allocation4 + $0x4c0] sm:$0xff]
    %v368 = vld [vmem:[#allocation4 + $0x4c8] sm:$0xff]
    %v369 = vld [vmem:[#allocation4 + $0x4d0] sm:$0xff]
    %v370 = vld [vmem:[#allocation4 + $0x4d8] sm:$0xff]
    %v371 = vld [vmem:[#allocation4 + $0x4e0] sm:$0xff]
    %v372 = vld [vmem:[#allocation4 + $0x4e8] sm:$0xff]
    %v373 = vld [vmem:[#allocation4 + $0x4f0] sm:$0xff]
    %v374 = vld [vmem:[#allocation4 + $0x4f8] sm:$0xff]
    %v375 = vld [vmem:[#allocation4 + $0x500] sm:$0xff]
    %v376 = vld [vmem:[#allocation4 + $0x508] sm:$0xff]
    %v377 = vld [vmem:[#allocation4 + $0x510] sm:$0xff]
    %v378 = vld [vmem:[#allocation4 + $0x518] sm:$0xff]
    %v379 = vld [vmem:[#allocation4 + $0x520] sm:$0xff]
    %v380 = vld [vmem:[#allocation4 + $0x528] sm:$0xff]
    %v381 = vld [vmem:[#allocation4 + $0x530] sm:$0xff]
    %v382 = vld [vmem:[#allocation4 + $0x538] sm:$0xff]
    %v383 = vld [vmem:[#allocation4 + $0x540] sm:$0xff]
    %v384 = vld [vmem:[#allocation4 + $0x548] sm:$0xff]
    %v385 = vld [vmem:[#allocation4 + $0x550] sm:$0xff]
    %v386 = vld [vmem:[#allocation4 + $0x558] sm:$0xff]
    %v387 = vld [vmem:[#allocation4 + $0x560] sm:$0xff]
    %v388 = vld [vmem:[#allocation4 + $0x568] sm:$0xff]
    %v389 = vld [vmem:[#allocation4 + $0x570] sm:$0xff]
    %v390 = vld [vmem:[#allocation4 + $0x578] sm:$0xff]
    %v391 = vld [vmem:[#allocation4 + $0x580] sm:$0xff]
    %v392 = vld [vmem:[#allocation4 + $0x588] sm:$0xff]
    %v393 = vld [vmem:[#allocation4 + $0x590] sm:$0xff]
    %v394 = vld [vmem:[#allocation4 + $0x598] sm:$0xff]
    %v395 = vld [vmem:[#allocation4 + $0x5a0] sm:$0xff]
    %v396 = vld [vmem:[#allocation4 + $0x5a8] sm:$0xff]
    %v397 = vld [vmem:[#allocation4 + $0x5b0] sm:$0xff]
    %v398 = vld [vmem:[#allocation4 + $0x5b8] sm:$0xff]
    %v399 = vld [vmem:[#allocation4 + $0x5c0] sm:$0xff]
    %v400 = vld [vmem:[#allocation4 + $0x5c8] sm:$0xff]
    %v401 = vld [vmem:[#allocation4 + $0x5d0] sm:$0xff]
    %v402 = vld [vmem:[#allocation4 + $0x5d8] sm:$0xff]
    %v403 = vld [vmem:[#allocation4 + $0x5e0] sm:$0xff]
    %v404 = vld [vmem:[#allocation4 + $0x5e8] sm:$0xff]
    %v405 = vld [vmem:[#allocation4 + $0x5f0] sm:$0xff]
    %v406 = vld [vmem:[#allocation4 + $0x5f8] sm:$0xff]
    %v407 = vlaneseq
    %v408 = vshrl.u32 %v407, 7
    %v409 = vsub.s32 2, %v408
    %v410 = vrot.slane %v51, %v409
    %v411 = vlaneseq
    %v412 = vshrl.u32 %v411, 7
    %v413 = vsub.s32 2, %v412
    %v414 = vrot.slane %v52, %v413
    %415 = vmatprep.subr.mxu0 %v344
    %416 = vmatpush1.msra.mxu0 %v343
    %417 = vmatprep.subr.mxu0 %v346
    %418 = vmatpush1.msra.mxu0 %v345
    %419 = vmatprep.subr.mxu0 %v348
    %420 = vmatpush1.msra.mxu0 %v347
    %421 = vmatprep.subr.mxu0 %v350
    %422 = vmatpush1.msra.mxu0 %v349
    %423 = vmatprep.subr.mxu0 %v352
    %424 = vmatpush1.msra.mxu0 %v351
    %425 = vmatprep.subr.mxu0 %v354
    %426 = vmatpush1.msra.mxu0 %v353
    %427 = vmatprep.subr.mxu0 %v356
    %428 = vmatpush1.msra.mxu0 %v355
    %429 = vmatprep.subr.mxu0 %v358
    %430 = vmatpush1.msra.mxu0 %v357
    %431 = vmatprep.subr.mxu0 %v360
    %432 = vmatpush1.msra.mxu0 %v359
    %433 = vmatprep.subr.mxu0 %v362
    %434 = vmatpush1.msra.mxu0 %v361
    %435 = vmatprep.subr.mxu0 %v364
    %436 = vmatpush1.msra.mxu0 %v363
    %437 = vmatprep.subr.mxu0 %v366
    %438 = vmatpush1.msra.mxu0 %v365
    %439 = vmatprep.subr.mxu0 %v368
    %440 = vmatpush1.msra.mxu0 %v367
    %441 = vmatprep.subr.mxu0 %v370
    %442 = vmatpush1.msra.mxu0 %v369
    %443 = vmatprep.subr.mxu0 %v372
    %444 = vmatpush1.msra.mxu0 %v371
    %445 = vmatprep.subr.mxu0 %v374
    %446 = vmatpush1.msra.mxu0 %v373
    %447 = vmatprep.subr.mxu0 %v376
    %448 = vmatpush1.msra.mxu0 %v375
    %449 = vmatprep.subr.mxu0 %v378
    %450 = vmatpush1.msra.mxu0 %v377
    %451 = vmatprep.subr.mxu0 %v380
    %452 = vmatpush1.msra.mxu0 %v379
    %453 = vmatprep.subr.mxu0 %v382
    %454 = vmatpush1.msra.mxu0 %v381
    %455 = vmatprep.subr.mxu0 %v384
    %456 = vmatpush1.msra.mxu0 %v383
    %457 = vmatprep.subr.mxu0 %v386
    %458 = vmatpush1.msra.mxu0 %v385
    %459 = vmatprep.subr.mxu0 %v388
    %460 = vmatpush1.msra.mxu0 %v387
    %461 = vmatprep.subr.mxu0 %v390
    %462 = vmatpush1.msra.mxu0 %v389
    %463 = vmatprep.subr.mxu0 %v392
    %464 = vmatpush1.msra.mxu0 %v391
    %465 = vmatprep.subr.mxu0 %v394
    %466 = vmatpush1.msra.mxu0 %v393
    %467 = vmatprep.subr.mxu0 %v396
    %468 = vmatpush1.msra.mxu0 %v395
    %469 = vmatprep.subr.mxu0 %v398
    %470 = vmatpush1.msra.mxu0 %v397
    %471 = vmatprep.subr.mxu0 %v400
    %472 = vmatpush1.msra.mxu0 %v399
    %473 = vmatprep.subr.mxu0 %v402
    %474 = vmatpush1.msra.mxu0 %v401
    %475 = vmatprep.subr.mxu0 %v404
    %476 = vmatpush1.msra.mxu0 %v403
    %477 = vmatprep.subr.mxu0 %v406
    %478 = vmatpush1.msra.mxu0 %v405
    %479 = vmatprep.mubr.f32.mxu0 %v341
    %480 = vmatmul.mubr.f32.gmra.mrb[0].mxu0 %v339
    %v481 = vpop.f32.mrb[0].mxu0
    %v482 = vadd.f32 %v410, %v481
    %v483 = vpop.f32.mrb[0].mxu0
    %v484 = vadd.f32 %v414, %v483
    %485 = vdwg.mxu0
    %v486 = vsub.f32 0.0, %v482
    %v487 = vsub.f32 0.0, %v484
    %v488 = vmul.f32 %v486, 1.442695
    %v489 = vpow.pop %v488
    %v490 = vmul.f32 %v487, 1.442695
    %v491 = vpow.pop %v490
    %v492 = vadd.f32 %v489, 1.0
    %v493 = vadd.f32 %v491, 1.0
    %v494 = vrcp.pop %v492
    %v495 = vmul.f32 1.0, %v494
    %v496 = vrcp.pop %v493
    %v497 = vmul.f32 1.0, %v496
    %v498 = vld [vmem:[#allocation4 + $0x600] sm:$0xff]
    %v499 = vld [vmem:[#allocation4 + $0x608] sm:$0xff]
    %v500 = vld [vmem:[#allocation4 + $0x610] sm:$0xff]
    %v501 = vld [vmem:[#allocation4 + $0x618] sm:$0xff]
    %v502 = vld [vmem:[#allocation4 + $0x620] sm:$0xff]
    %v503 = vld [vmem:[#allocation4 + $0x628] sm:$0xff]
    %v504 = vld [vmem:[#allocation4 + $0x630] sm:$0xff]
    %v505 = vld [vmem:[#allocation4 + $0x638] sm:$0xff]
    %v506 = vld [vmem:[#allocation4 + $0x640] sm:$0xff]
    %v507 = vld [vmem:[#allocation4 + $0x648] sm:$0xff]
    %v508 = vld [vmem:[#allocation4 + $0x650] sm:$0xff]
    %v509 = vld [vmem:[#allocation4 + $0x658] sm:$0xff]
    %v510 = vld [vmem:[#allocation4 + $0x660] sm:$0xff]
    %v511 = vld [vmem:[#allocation4 + $0x668] sm:$0xff]
    %v512 = vld [vmem:[#allocation4 + $0x670] sm:$0xff]
    %v513 = vld [vmem:[#allocation4 + $0x678] sm:$0xff]
    %v514 = vld [vmem:[#allocation4 + $0x680] sm:$0xff]
    %v515 = vld [vmem:[#allocation4 + $0x688] sm:$0xff]
    %v516 = vld [vmem:[#allocation4 + $0x690] sm:$0xff]
    %v517 = vld [vmem:[#allocation4 + $0x698] sm:$0xff]
    %v518 = vld [vmem:[#allocation4 + $0x6a0] sm:$0xff]
    %v519 = vld [vmem:[#allocation4 + $0x6a8] sm:$0xff]
    %v520 = vld [vmem:[#allocation4 + $0x6b0] sm:$0xff]
    %v521 = vld [vmem:[#allocation4 + $0x6b8] sm:$0xff]
    %v522 = vld [vmem:[#allocation4 + $0x6c0] sm:$0xff]
    %v523 = vld [vmem:[#allocation4 + $0x6c8] sm:$0xff]
    %v524 = vld [vmem:[#allocation4 + $0x6d0] sm:$0xff]
    %v525 = vld [vmem:[#allocation4 + $0x6d8] sm:$0xff]
    %v526 = vld [vmem:[#allocation4 + $0x6e0] sm:$0xff]
    %v527 = vld [vmem:[#allocation4 + $0x6e8] sm:$0xff]
    %v528 = vld [vmem:[#allocation4 + $0x6f0] sm:$0xff]
    %v529 = vld [vmem:[#allocation4 + $0x6f8] sm:$0xff]
    %v530 = vld [vmem:[#allocation4 + $0x700] sm:$0xff]
    %v531 = vld [vmem:[#allocation4 + $0x708] sm:$0xff]
    %v532 = vld [vmem:[#allocation4 + $0x710] sm:$0xff]
    %v533 = vld [vmem:[#allocation4 + $0x718] sm:$0xff]
    %v534 = vld [vmem:[#allocation4 + $0x720] sm:$0xff]
    %v535 = vld [vmem:[#allocation4 + $0x728] sm:$0xff]
    %v536 = vld [vmem:[#allocation4 + $0x730] sm:$0xff]
    %v537 = vld [vmem:[#allocation4 + $0x738] sm:$0xff]
    %v538 = vld [vmem:[#allocation4 + $0x740] sm:$0xff]
    %v539 = vld [vmem:[#allocation4 + $0x748] sm:$0xff]
    %v540 = vld [vmem:[#allocation4 + $0x750] sm:$0xff]
    %v541 = vld [vmem:[#allocation4 + $0x758] sm:$0xff]
    %v542 = vld [vmem:[#allocation4 + $0x760] sm:$0xff]
    %v543 = vld [vmem:[#allocation4 + $0x768] sm:$0xff]
    %v544 = vld [vmem:[#allocation4 + $0x770] sm:$0xff]
    %v545 = vld [vmem:[#allocation4 + $0x778] sm:$0xff]
    %v546 = vld [vmem:[#allocation4 + $0x780] sm:$0xff]
    %v547 = vld [vmem:[#allocation4 + $0x788] sm:$0xff]
    %v548 = vld [vmem:[#allocation4 + $0x790] sm:$0xff]
    %v549 = vld [vmem:[#allocation4 + $0x798] sm:$0xff]
    %v550 = vld [vmem:[#allocation4 + $0x7a0] sm:$0xff]
    %v551 = vld [vmem:[#allocation4 + $0x7a8] sm:$0xff]
    %v552 = vld [vmem:[#allocation4 + $0x7b0] sm:$0xff]
    %v553 = vld [vmem:[#allocation4 + $0x7b8] sm:$0xff]
    %v554 = vld [vmem:[#allocation4 + $0x7c0] sm:$0xff]
    %v555 = vld [vmem:[#allocation4 + $0x7c8] sm:$0xff]
    %v556 = vld [vmem:[#allocation4 + $0x7d0] sm:$0xff]
    %v557 = vld [vmem:[#allocation4 + $0x7d8] sm:$0xff]
    %v558 = vld [vmem:[#allocation4 + $0x7e0] sm:$0xff]
    %v559 = vld [vmem:[#allocation4 + $0x7e8] sm:$0xff]
    %v560 = vld [vmem:[#allocation4 + $0x7f0] sm:$0xff]
    %v561 = vld [vmem:[#allocation4 + $0x7f8] sm:$0xff]
    %v562 = vlaneseq
    %v563 = vshrl.u32 %v562, 7
    %v564 = vsub.s32 3, %v563
    %v565 = vrot.slane %v51, %v564
    %v566 = vlaneseq
    %v567 = vshrl.u32 %v566, 7
    %v568 = vsub.s32 3, %v567
    %v569 = vrot.slane %v52, %v568
    %570 = vmatprep.subr.mxu0 %v499
    %571 = vmatpush1.msra.mxu0 %v498
    %572 = vmatprep.subr.mxu0 %v501
    %573 = vmatpush1.msra.mxu0 %v500
    %574 = vmatprep.subr.mxu0 %v503
    %575 = vmatpush1.msra.mxu0 %v502
    %576 = vmatprep.subr.mxu0 %v505
    %577 = vmatpush1.msra.mxu0 %v504
    %578 = vmatprep.subr.mxu0 %v507
    %579 = vmatpush1.msra.mxu0 %v506
    %580 = vmatprep.subr.mxu0 %v509
    %581 = vmatpush1.msra.mxu0 %v508
    %582 = vmatprep.subr.mxu0 %v511
    %583 = vmatpush1.msra.mxu0 %v510
    %584 = vmatprep.subr.mxu0 %v513
    %585 = vmatpush1.msra.mxu0 %v512
    %586 = vmatprep.subr.mxu0 %v515
    %587 = vmatpush1.msra.mxu0 %v514
    %588 = vmatprep.subr.mxu0 %v517
    %589 = vmatpush1.msra.mxu0 %v516
    %590 = vmatprep.subr.mxu0 %v519
    %591 = vmatpush1.msra.mxu0 %v518
    %592 = vmatprep.subr.mxu0 %v521
    %593 = vmatpush1.msra.mxu0 %v520
    %594 = vmatprep.subr.mxu0 %v523
    %595 = vmatpush1.msra.mxu0 %v522
    %596 = vmatprep.subr.mxu0 %v525
    %597 = vmatpush1.msra.mxu0 %v524
    %598 = vmatprep.subr.mxu0 %v527
    %599 = vmatpush1.msra.mxu0 %v526
    %600 = vmatprep.subr.mxu0 %v529
    %601 = vmatpush1.msra.mxu0 %v528
    %602 = vmatprep.subr.mxu0 %v531
    %603 = vmatpush1.msra.mxu0 %v530
    %604 = vmatprep.subr.mxu0 %v533
    %605 = vmatpush1.msra.mxu0 %v532
    %606 = vmatprep.subr.mxu0 %v535
    %607 = vmatpush1.msra.mxu0 %v534
    %608 = vmatprep.subr.mxu0 %v537
    %609 = vmatpush1.msra.mxu0 %v536
    %610 = vmatprep.subr.mxu0 %v539
    %611 = vmatpush1.msra.mxu0 %v538
    %612 = vmatprep.subr.mxu0 %v541
    %613 = vmatpush1.msra.mxu0 %v540
    %614 = vmatprep.subr.mxu0 %v543
    %615 = vmatpush1.msra.mxu0 %v542
    %616 = vmatprep.subr.mxu0 %v545
    %617 = vmatpush1.msra.mxu0 %v544
    %618 = vmatprep.subr.mxu0 %v547
    %619 = vmatpush1.msra.mxu0 %v546
    %620 = vmatprep.subr.mxu0 %v549
    %621 = vmatpush1.msra.mxu0 %v548
    %622 = vmatprep.subr.mxu0 %v551
    %623 = vmatpush1.msra.mxu0 %v550
    %624 = vmatprep.subr.mxu0 %v553
    %625 = vmatpush1.msra.mxu0 %v552
    %626 = vmatprep.subr.mxu0 %v555
    %627 = vmatpush1.msra.mxu0 %v554
    %628 = vmatprep.subr.mxu0 %v557
    %629 = vmatpush1.msra.mxu0 %v556
    %630 = vmatprep.subr.mxu0 %v559
    %631 = vmatpush1.msra.mxu0 %v558
    %632 = vmatprep.subr.mxu0 %v561
    %633 = vmatpush1.msra.mxu0 %v560
    %634 = vmatprep.mubr.f32.mxu0 %v497
    %635 = vmatmul.mubr.f32.gmra.mrb[0].mxu0 %v495
    %v636 = vpop.f32.mrb[0].mxu0
    %v637 = vadd.f32 %v565, %v636
    %v638 = vpop.f32.mrb[0].mxu0
    %v639 = vadd.f32 %v569, %v638
    %640 = vdwg.mxu0
    %v641 = vsub.f32 0.0, %v637
    %v642 = vsub.f32 0.0, %v639
    %v643 = vmul.f32 %v641, 1.442695
    %v644 = vpow.pop %v643
    %v645 = vmul.f32 %v642, 1.442695
    %v646 = vpow.pop %v645
    %v647 = vadd.f32 %v644, 1.0
    %v648 = vadd.f32 %v646, 1.0
    %v649 = vrcp.pop %v647
    %v650 = vmul.f32 1.0, %v649
    %v651 = vrcp.pop %v648
    %v652 = vmul.f32 1.0, %v651
    %v653 = vmul.f32 %v650, 1.442695
    %v654 = vpow.pop %v653
    %v655 = vmul.f32 %v652, 1.442695
    %v656 = vpow.pop %v655
    %vm657 = vcmask 31744
    %v658 = vsel %vm657, %v654, 0.0
    %659 = vadd.xlane.f32.xlu0 %v658
    %v660 = vpop.xlane.xlu0 %659
    %v661 = vrcp.pop %v660
    %v662 = vmul.f32 %v654, %v661
    %v663 = vmul.f32 %v656, %v661
    %v664 = vld [vmem:[#allocation4 + $0x800] sm:$0xff]
    %v665 = vld [vmem:[#allocation4 + $0x808] sm:$0xff]
    %v666 = vld [vmem:[#allocation4 + $0x810] sm:$0xff]
    %v667 = vld [vmem:[#allocation4 + $0x818] sm:$0xff]
    %v668 = vld [vmem:[#allocation4 + $0x820] sm:$0xff]
    %v669 = vld [vmem:[#allocation4 + $0x828] sm:$0xff]
    %v670 = vld [vmem:[#allocation4 + $0x830] sm:$0xff]
    %v671 = vld [vmem:[#allocation4 + $0x838] sm:$0xff]
    %v672 = vld [vmem:[#allocation4 + $0x840] sm:$0xff]
    %v673 = vld [vmem:[#allocation4 + $0x848] sm:$0xff]
    %v674 = vld [vmem:[#allocation4 + $0x850] sm:$0xff]
    %v675 = vld [vmem:[#allocation4 + $0x858] sm:$0xff]
    %v676 = vld [vmem:[#allocation4 + $0x860] sm:$0xff]
    %v677 = vld [vmem:[#allocation4 + $0x868] sm:$0xff]
    %v678 = vld [vmem:[#allocation4 + $0x870] sm:$0xff]
    %v679 = vld [vmem:[#allocation4 + $0x878] sm:$0xff]
    %v680 = vld [vmem:[#allocation4 + $0x880] sm:$0xff]
    %v681 = vld [vmem:[#allocation4 + $0x888] sm:$0xff]
    %v682 = vld [vmem:[#allocation4 + $0x890] sm:$0xff]
    %v683 = vld [vmem:[#allocation4 + $0x898] sm:$0xff]
    %v684 = vld [vmem:[#allocation4 + $0x8a0] sm:$0xff]
    %v685 = vld [vmem:[#allocation4 + $0x8a8] sm:$0xff]
    %v686 = vld [vmem:[#allocation4 + $0x8b0] sm:$0xff]
    %v687 = vld [vmem:[#allocation4 + $0x8b8] sm:$0xff]
    %v688 = vld [vmem:[#allocation4 + $0x8c0] sm:$0xff]
    %v689 = vld [vmem:[#allocation4 + $0x8c8] sm:$0xff]
    %v690 = vld [vmem:[#allocation4 + $0x8d0] sm:$0xff]
    %v691 = vld [vmem:[#allocation4 + $0x8d8] sm:$0xff]
    %v692 = vld [vmem:[#allocation4 + $0x8e0] sm:$0xff]
    %v693 = vld [vmem:[#allocation4 + $0x8e8] sm:$0xff]
    %v694 = vld [vmem:[#allocation4 + $0x8f0] sm:$0xff]
    %v695 = vld [vmem:[#allocation4 + $0x8f8] sm:$0xff]
    %v696 = vld [vmem:[#allocation4 + $0x900] sm:$0xff]
    %v697 = vld [vmem:[#allocation4 + $0x908] sm:$0xff]
    %v698 = vld [vmem:[#allocation4 + $0x910] sm:$0xff]
    %v699 = vld [vmem:[#allocation4 + $0x918] sm:$0xff]
    %v700 = vld [vmem:[#allocation4 + $0x920] sm:$0xff]
    %v701 = vld [vmem:[#allocation4 + $0x928] sm:$0xff]
    %v702 = vld [vmem:[#allocation4 + $0x930] sm:$0xff]
    %v703 = vld [vmem:[#allocation4 + $0x938] sm:$0xff]
    %v704 = vld [vmem:[#allocation4 + $0x940] sm:$0xff]
    %v705 = vld [vmem:[#allocation4 + $0x948] sm:$0xff]
    %v706 = vld [vmem:[#allocation4 + $0x950] sm:$0xff]
    %v707 = vld [vmem:[#allocation4 + $0x958] sm:$0xff]
    %v708 = vld [vmem:[#allocation4 + $0x960] sm:$0xff]
    %v709 = vld [vmem:[#allocation4 + $0x968] sm:$0xff]
    %v710 = vld [vmem:[#allocation4 + $0x970] sm:$0xff]
    %v711 = vld [vmem:[#allocation4 + $0x978] sm:$0xff]
    %v712 = vld [vmem:[#allocation4 + $0x980] sm:$0xff]
    %v713 = vld [vmem:[#allocation4 + $0x988] sm:$0xff]
    %v714 = vld [vmem:[#allocation4 + $0x990] sm:$0xff]
    %v715 = vld [vmem:[#allocation4 + $0x998] sm:$0xff]
    %v716 = vld [vmem:[#allocation4 + $0x9a0] sm:$0xff]
    %v717 = vld [vmem:[#allocation4 + $0x9a8] sm:$0xff]
    %v718 = vld [vmem:[#allocation4 + $0x9b0] sm:$0xff]
    %v719 = vld [vmem:[#allocation4 + $0x9b8] sm:$0xff]
    %v720 = vld [vmem:[#allocation4 + $0x9c0] sm:$0xff]
    %v721 = vld [vmem:[#allocation4 + $0x9c8] sm:$0xff]
    %v722 = vld [vmem:[#allocation4 + $0x9d0] sm:$0xff]
    %v723 = vld [vmem:[#allocation4 + $0x9d8] sm:$0xff]
    %v724 = vld [vmem:[#allocation4 + $0x9e0] sm:$0xff]
    %v725 = vld [vmem:[#allocation4 + $0x9e8] sm:$0xff]
    %v726 = vld [vmem:[#allocation4 + $0x9f0] sm:$0xff]
    %v727 = vld [vmem:[#allocation4 + $0x9f8] sm:$0xff]
    %728 = vmatprep.subr.mxu0 %v665
    %729 = vmatpush1.msra.mxu0 %v664
    %730 = vmatprep.subr.mxu0 %v667
    %731 = vmatpush1.msra.mxu0 %v666
    %732 = vmatprep.subr.mxu0 %v669
    %733 = vmatpush1.msra.mxu0 %v668
    %734 = vmatprep.subr.mxu0 %v671
    %735 = vmatpush1.msra.mxu0 %v670
    %736 = vmatprep.subr.mxu0 %v673
    %737 = vmatpush1.msra.mxu0 %v672
    %738 = vmatprep.subr.mxu0 %v675
    %739 = vmatpush1.msra.mxu0 %v674
    %740 = vmatprep.subr.mxu0 %v677
    %741 = vmatpush1.msra.mxu0 %v676
    %742 = vmatprep.subr.mxu0 %v679
    %743 = vmatpush1.msra.mxu0 %v678
    %744 = vmatprep.subr.mxu0 %v681
    %745 = vmatpush1.msra.mxu0 %v680
    %746 = vmatprep.subr.mxu0 %v683
    %747 = vmatpush1.msra.mxu0 %v682
    %748 = vmatprep.subr.mxu0 %v685
    %749 = vmatpush1.msra.mxu0 %v684
    %750 = vmatprep.subr.mxu0 %v687
    %751 = vmatpush1.msra.mxu0 %v686
    %752 = vmatprep.subr.mxu0 %v689
    %753 = vmatpush1.msra.mxu0 %v688
    %754 = vmatprep.subr.mxu0 %v691
    %755 = vmatpush1.msra.mxu0 %v690
    %756 = vmatprep.subr.mxu0 %v693
    %757 = vmatpush1.msra.mxu0 %v692
    %758 = vmatprep.subr.mxu0 %v695
    %759 = vmatpush1.msra.mxu0 %v694
    %760 = vmatprep.subr.mxu0 %v697
    %761 = vmatpush1.msra.mxu0 %v696
    %762 = vmatprep.subr.mxu0 %v699
    %763 = vmatpush1.msra.mxu0 %v698
    %764 = vmatprep.subr.mxu0 %v701
    %765 = vmatpush1.msra.mxu0 %v700
    %766 = vmatprep.subr.mxu0 %v703
    %767 = vmatpush1.msra.mxu0 %v702
    %768 = vmatprep.subr.mxu0 %v705
    %769 = vmatpush1.msra.mxu0 %v704
    %770 = vmatprep.subr.mxu0 %v707
    %771 = vmatpush1.msra.mxu0 %v706
    %772 = vmatprep.subr.mxu0 %v709
    %773 = vmatpush1.msra.mxu0 %v708
    %774 = vmatprep.subr.mxu0 %v711
    %775 = vmatpush1.msra.mxu0 %v710
    %776 = vmatprep.subr.mxu0 %v713
    %777 = vmatpush1.msra.mxu0 %v712
    %778 = vmatprep.subr.mxu0 %v715
    %779 = vmatpush1.msra.mxu0 %v714
    %780 = vmatprep.subr.mxu0 %v717
    %781 = vmatpush1.msra.mxu0 %v716
    %782 = vmatprep.subr.mxu0 %v719
    %783 = vmatpush1.msra.mxu0 %v718
    %784 = vmatprep.subr.mxu0 %v721
    %785 = vmatpush1.msra.mxu0 %v720
    %786 = vmatprep.subr.mxu0 %v723
    %787 = vmatpush1.msra.mxu0 %v722
    %788 = vmatprep.subr.mxu0 %v725
    %789 = vmatpush1.msra.mxu0 %v724
    %790 = vmatprep.subr.mxu0 %v727
    %791 = vmatpush1.msra.mxu0 %v726
    %792 = vmatprep.mubr.f32.mxu0 %v663
    %793 = vmatmul.mubr.f32.gmra.mrb[0].mxu0 %v662
    %v794 = vpop.f32.mrb[0].mxu0
    %v795 = vadd.f32 0.0, %v794
    %v796 = vpop.f32.mrb[0].mxu0
    %v797 = vadd.f32 0.0, %v796
    %798 = vdwg.mxu0
    %v799 = vmul.f32 %v795, %v339
    %v800 = vmul.f32 %v797, %v341
    %v801 = vld [vmem:[#allocation4 + $0xa00] sm:$0xff]
    %v802 = vld [vmem:[#allocation4 + $0xa08] sm:$0xff]
    %v803 = vld [vmem:[#allocation4 + $0xa10] sm:$0xff]
    %v804 = vld [vmem:[#allocation4 + $0xa18] sm:$0xff]
    %v805 = vld [vmem:[#allocation4 + $0xa20] sm:$0xff]
    %v806 = vld [vmem:[#allocation4 + $0xa28] sm:$0xff]
    %v807 = vld [vmem:[#allocation4 + $0xa30] sm:$0xff]
    %v808 = vld [vmem:[#allocation4 + $0xa38] sm:$0xff]
    %v809 = vld [vmem:[#allocation4 + $0xa40] sm:$0xff]
    %v810 = vld [vmem:[#allocation4 + $0xa48] sm:$0xff]
    %v811 = vld [vmem:[#allocation4 + $0xa50] sm:$0xff]
    %v812 = vld [vmem:[#allocation4 + $0xa58] sm:$0xff]
    %v813 = vld [vmem:[#allocation4 + $0xa60] sm:$0xff]
    %v814 = vld [vmem:[#allocation4 + $0xa68] sm:$0xff]
    %v815 = vld [vmem:[#allocation4 + $0xa70] sm:$0xff]
    %v816 = vld [vmem:[#allocation4 + $0xa78] sm:$0xff]
    %v817 = vld [vmem:[#allocation4 + $0xa80] sm:$0xff]
    %v818 = vld [vmem:[#allocation4 + $0xa88] sm:$0xff]
    %v819 = vld [vmem:[#allocation4 + $0xa90] sm:$0xff]
    %v820 = vld [vmem:[#allocation4 + $0xa98] sm:$0xff]
    %v821 = vld [vmem:[#allocation4 + $0xaa0] sm:$0xff]
    %v822 = vld [vmem:[#allocation4 + $0xaa8] sm:$0xff]
    %v823 = vld [vmem:[#allocation4 + $0xab0] sm:$0xff]
    %v824 = vld [vmem:[#allocation4 + $0xab8] sm:$0xff]
    %v825 = vld [vmem:[#allocation4 + $0xac0] sm:$0xff]
    %v826 = vld [vmem:[#allocation4 + $0xac8] sm:$0xff]
    %v827 = vld [vmem:[#allocation4 + $0xad0] sm:$0xff]
    %v828 = vld [vmem:[#allocation4 + $0xad8] sm:$0xff]
    %v829 = vld [vmem:[#allocation4 + $0xae0] sm:$0xff]
    %v830 = vld [vmem:[#allocation4 + $0xae8] sm:$0xff]
    %v831 = vld [vmem:[#allocation4 + $0xaf0] sm:$0xff]
    %v832 = vld [vmem:[#allocation4 + $0xaf8] sm:$0xff]
    %v833 = vld [vmem:[#allocation4 + $0xb00] sm:$0xff]
    %v834 = vld [vmem:[#allocation4 + $0xb08] sm:$0xff]
    %v835 = vld [vmem:[#allocation4 + $0xb10] sm:$0xff]
    %v836 = vld [vmem:[#allocation4 + $0xb18] sm:$0xff]
    %v837 = vld [vmem:[#allocation4 + $0xb20] sm:$0xff]
    %v838 = vld [vmem:[#allocation4 + $0xb28] sm:$0xff]
    %v839 = vld [vmem:[#allocation4 + $0xb30] sm:$0xff]
    %v840 = vld [vmem:[#allocation4 + $0xb38] sm:$0xff]
    %v841 = vld [vmem:[#allocation4 + $0xb40] sm:$0xff]
    %v842 = vld [vmem:[#allocation4 + $0xb48] sm:$0xff]
    %v843 = vld [vmem:[#allocation4 + $0xb50] sm:$0xff]
    %v844 = vld [vmem:[#allocation4 + $0xb58] sm:$0xff]
    %v845 = vld [vmem:[#allocation4 + $0xb60] sm:$0xff]
    %v846 = vld [vmem:[#allocation4 + $0xb68] sm:$0xff]
    %v847 = vld [vmem:[#allocation4 + $0xb70] sm:$0xff]
    %v848 = vld [vmem:[#allocation4 + $0xb78] sm:$0xff]
    %v849 = vld [vmem:[#allocation4 + $0xb80] sm:$0xff]
    %v850 = vld [vmem:[#allocation4 + $0xb88] sm:$0xff]
    %v851 = vld [vmem:[#allocation4 + $0xb90] sm:$0xff]
    %v852 = vld [vmem:[#allocation4 + $0xb98] sm:$0xff]
    %v853 = vld [vmem:[#allocation4 + $0xba0] sm:$0xff]
    %v854 = vld [vmem:[#allocation4 + $0xba8] sm:$0xff]
    %v855 = vld [vmem:[#allocation4 + $0xbb0] sm:$0xff]
    %v856 = vld [vmem:[#allocation4 + $0xbb8] sm:$0xff]
    %v857 = vld [vmem:[#allocation4 + $0xbc0] sm:$0xff]
    %v858 = vld [vmem:[#allocation4 + $0xbc8] sm:$0xff]
    %v859 = vld [vmem:[#allocation4 + $0xbd0] sm:$0xff]
    %v860 = vld [vmem:[#allocation4 + $0xbd8] sm:$0xff]
    %v861 = vld [vmem:[#allocation4 + $0xbe0] sm:$0xff]
    %v862 = vld [vmem:[#allocation4 + $0xbe8] sm:$0xff]
    %v863 = vld [vmem:[#allocation4 + $0xbf0] sm:$0xff]
    %v864 = vld [vmem:[#allocation4 + $0xbf8] sm:$0xff]
    %865 = vmatprep.subr.mxu0 %v802
    %866 = vmatpush1.msra.mxu0 %v801
    %867 = vmatprep.subr.mxu0 %v804
    %868 = vmatpush1.msra.mxu0 %v803
    %869 = vmatprep.subr.mxu0 %v806
    %870 = vmatpush1.msra.mxu0 %v805
    %871 = vmatprep.subr.mxu0 %v808
    %872 = vmatpush1.msra.mxu0 %v807
    %873 = vmatprep.subr.mxu0 %v810
    %874 = vmatpush1.msra.mxu0 %v809
    %875 = vmatprep.subr.mxu0 %v812
    %876 = vmatpush1.msra.mxu0 %v811
    %877 = vmatprep.subr.mxu0 %v814
    %878 = vmatpush1.msra.mxu0 %v813
    %879 = vmatprep.subr.mxu0 %v816
    %880 = vmatpush1.msra.mxu0 %v815
    %881 = vmatprep.subr.mxu0 %v818
    %882 = vmatpush1.msra.mxu0 %v817
    %883 = vmatprep.subr.mxu0 %v820
    %884 = vmatpush1.msra.mxu0 %v819
    %885 = vmatprep.subr.mxu0 %v822
    %886 = vmatpush1.msra.mxu0 %v821
    %887 = vmatprep.subr.mxu0 %v824
    %888 = vmatpush1.msra.mxu0 %v823
    %889 = vmatprep.subr.mxu0 %v826
    %890 = vmatpush1.msra.mxu0 %v825
    %891 = vmatprep.subr.mxu0 %v828
    %892 = vmatpush1.msra.mxu0 %v827
    %893 = vmatprep.subr.mxu0 %v830
    %894 = vmatpush1.msra.mxu0 %v829
    %895 = vmatprep.subr.mxu0 %v832
    %896 = vmatpush1.msra.mxu0 %v831
    %897 = vmatprep.subr.mxu0 %v834
    %898 = vmatpush1.msra.mxu0 %v833
    %899 = vmatprep.subr.mxu0 %v836
    %900 = vmatpush1.msra.mxu0 %v835
    %901 = vmatprep.subr.mxu0 %v838
    %902 = vmatpush1.msra.mxu0 %v837
    %903 = vmatprep.subr.mxu0 %v840
    %904 = vmatpush1.msra.mxu0 %v839
    %905 = vmatprep.subr.mxu0 %v842
    %906 = vmatpush1.msra.mxu0 %v841
    %907 = vmatprep.subr.mxu0 %v844
    %908 = vmatpush1.msra.mxu0 %v843
    %909 = vmatprep.subr.mxu0 %v846
    %910 = vmatpush1.msra.mxu0 %v845
    %911 = vmatprep.subr.mxu0 %v848
    %912 = vmatpush1.msra.mxu0 %v847
    %913 = vmatprep.subr.mxu0 %v850
    %914 = vmatpush1.msra.mxu0 %v849
    %915 = vmatprep.subr.mxu0 %v852
    %916 = vmatpush1.msra.mxu0 %v851
    %917 = vmatprep.subr.mxu0 %v854
    %918 = vmatpush1.msra.mxu0 %v853
    %919 = vmatprep.subr.mxu0 %v856
    %920 = vmatpush1.msra.mxu0 %v855
    %921 = vmatprep.subr.mxu0 %v858
    %922 = vmatpush1.msra.mxu0 %v857
    %923 = vmatprep.subr.mxu0 %v860
    %924 = vmatpush1.msra.mxu0 %v859
    %925 = vmatprep.subr.mxu0 %v862
    %926 = vmatpush1.msra.mxu0 %v861
    %927 = vmatprep.subr.mxu0 %v864
    %928 = vmatpush1.msra.mxu0 %v863
    %929 = vmatprep.mubr.f32.mxu0 %v800
    %930 = vmatmul.mubr.f32.gmra.mrb[0].mxu0 %v799
    %v931 = vpop.f32.mrb[0].mxu0
    %v932 = vadd.f32 0.0, %v931
    %v933 = vpop.f32.mrb[0].mxu0
    %934 = vdwg.mxu0
    %936 = vrot.lane.b32.xlu0 %v932, 96
    %v937 = vpop.permute.xlu0 %936
    %v939 = vmul.f32 %v932, %v937
    %vm940 = vcmask 261120
    %v941 = vsel %vm940, %v939, 0.0
    %942 = vadd.xlane.f32.xlu0 %v941
    %v943 = vpop.xlane.xlu0 %942
    %v944 = vsub.f32 0.0, %v943
    %v945 = vmul.f32 %v944, 1.442695
    %v946 = vpow.pop %v945
    %v947 = vadd.f32 %v946, 1.0
    %v948 = vrcp.pop %v947
    %v949 = vmul.f32 1.0, %v948
    %vm950 = vcmask 7168
    %951 = vst.msk [vmem:[%s3] sm:$0xff] %vm950, %v949
    // Predicated region
    $region26: #{tpu_custom_call.1} parent=1 // pred_check
      _
    $region27: #{tpu_custom_call.1} parent=1 // pred_check_branch
      %953 = sbr.rel (0) target = $region29
    $region28: #{tpu_custom_call.1} parent=1 // pred_region
      _
    $region29: #{tpu_custom_call.1} parent=1 // pred_fallthru
      _
    // Predicated region
    $region30: #{tpu_custom_call.1} parent=1 // pred_check
      _
    $region31: #{tpu_custom_call.1} parent=1 // pred_check_branch
      %955 = sbr.rel (0) target = $region33
    $region32: #{tpu_custom_call.1} parent=1 // pred_region
      _
    $region33: #{tpu_custom_call.1} parent=1 // pred_fallthru
      _
    %956 = vsyncpa [#allocation3], 1
    %957 = vsyncpa [#allocation5], 1

</llo_original>
